<compile_context>
chip_gen: v7x
topology: tpu7x:2x2x1
jax: 0.10.0
libtpu: 0.0.40
codegen_flags: <defaults>
</compile_context>

<pallas_src>
import functools
import math

import numpy as np
import jax
import jax.numpy as jnp
from jax import lax
from jax.experimental import pallas as pl
from jax.experimental.pallas import tpu as pltpu

MAX_TILE = 512        # max points per Pallas grid step
MIN_TILE = 128        # min points per Pallas grid step (sublane/lane friendly)
MIN_STEPS = 4         # aim for >= this many grid steps per pallas_call
CHUNK = 8             # in-kernel point sub-chunk (register-resident work set)
BN_EPS = 1e-5

# The point-axis grid is fully independent -> "parallel" lets v7x shard it
# across its two TensorCores (no-op on single-TC v5e/v6e).  32 MiB scoped VMEM
# covers the largest tile (kpconv at tile=512, C=64, H=8, K=13 needs ~11 MiB
# incl. double buffering + scratch) and is safe on every generation (v7x
# physical VMEM is 64 MiB).
_COMPILER_PARAMS = pltpu.CompilerParams(
    dimension_semantics=("parallel",),
    vmem_limit_bytes=32 * 1024 * 1024,
)


# ----------------------------------------------------------------------------
# Pallas kernels
# ----------------------------------------------------------------------------
def _apply_act(y, act):
    if act == "relu":
        return jnp.maximum(y, 0.0)
    if act == "sigmoid":
        return jax.nn.sigmoid(y)
    return y


def _linear_kernel(x_ref, w_ref, s_ref, b_ref, o_ref, *, act):
    # act((x @ w) * scale + shift): Linear + folded inference BatchNorm.
    y = jnp.dot(x_ref[...], w_ref[...], preferred_element_type=jnp.float32)
    y = y * s_ref[...] + b_ref[...]
    o_ref[...] = _apply_act(y, act).astype(o_ref.dtype)


def _linear_res_kernel(x_ref, w_ref, s_ref, b_ref, r_ref, o_ref, *, act):
    # act((x @ w) * scale + shift + residual): fused fc3 + norm3 + skip + ReLU.
    y = jnp.dot(x_ref[...], w_ref[...], preferred_element_type=jnp.float32)
    y = y * s_ref[...] + b_ref[...] + r_ref[...].astype(jnp.float32)
    o_ref[...] = _apply_act(y, act).astype(o_ref.dtype)


def _kpconvx_kernel(*refs, inv_sigma, has_mod, chunk, cb):
    """Fused KPConvX / KPConvD aggregation + norm2(BN) + ReLU (chunked).

    Ref layout (has_mod=True):
      rel   [T, H, 3]   f32   neighbor coords relative to query point
      nf    [T, H, C]   bf16  gathered neighbor features (0 where invalid)
      feat  [T, C]      bf16  query features (modulation generator input)
      mod_w [C, K*CB]   bf16  modulation weights, group->channel expanded,
                              each k-block 128-lane padded (CB = ceil128(C))
      mod_b [1, K*CB]   f32
      dw_p  [1, K*CB]   f32   depthwise weights, same padded layout
      kpt   [3, K]      f32   kernel points (transposed)
      n2s   [1, C]      f32   fused norm2 scale
      n2b   [1, C]      f32   fused norm2 shift
      o     [T, C]      bf16
      mods  [T, K*CB]   f32   VMEM scratch (modulation * dw, per point)
    """
    if has_mod:
        (rel_ref, nf_ref, feat_ref, mod_w_ref, mod_b_ref, dwp_ref,
         kpt_ref, n2s_ref, n2b_ref, o_ref, mods_ref) = refs
    else:
        (rel_ref, nf_ref, kpt_ref, dw_ref, n2s_ref, n2b_ref, o_ref) = refs

    kpt = kpt_ref[...]                       # [3, K]
    n_k = kpt.shape[1]
    h = rel_ref.shape[1]
    c = o_ref.shape[1]
    tile = o_ref.shape[0]
    kx = kpt[0:1, :][None, :, :]             # [1, 1, K]
    ky = kpt[1:2, :][None, :, :]
    kz = kpt[2:3, :][None, :, :]
    n2s = n2s_ref[...]
    n2b = n2b_ref[...]

    if has_mod:
        # Whole-tile modulation generator on the MXU (large M keeps it busy);
        # dw is folded in and each k-block lives at a 128-lane-aligned offset.
        # TODO(synk): KPConvX mod_grp_norm (group-norm of modulations) omitted.
        logits = jnp.dot(feat_ref[...], mod_w_ref[...],
                         preferred_element_type=jnp.float32) + mod_b_ref[...]
        mods_ref[...] = jax.nn.sigmoid(logits) * dwp_ref[...]
    else:
        dw = dw_ref[...]                     # [K, C] f32

    def chunk_body(ci, carry):
        s = pl.multiple_of(ci * chunk, chunk)
        relc = rel_ref[pl.ds(s, chunk)]                      # [ch, H, 3]
        dx = relc[:, :, 0:1] - kx
        dy = relc[:, :, 1:2] - ky
        dz = relc[:, :, 2:3] - kz
        d2 = dx * dx + dy * dy + dz * dz                     # [ch, H, K]
        infl = jnp.maximum(0.0, 1.0 - jnp.sqrt(d2) * inv_sigma)

        if has_mod:
            # W[n,h,c] = sum_k infl[n,h,k] * (dw * mod)[n,k,c]
            w = jnp.zeros((chunk, h, c), jnp.float32)
            for k in range(n_k):                             # K <= 13, unrolled
                mk = mods_ref[pl.ds(s, chunk), k * cb:k * cb + c]   # [ch, C]
                w = w + infl[:, :, k:k + 1] * mk[:, None, :]
        else:
            # KPConvD: single MXU matmul over the (ch*H, K) influence slab.
            p = jnp.dot(infl.reshape(chunk * h, n_k), dw,
                        preferred_element_type=jnp.float32)
            w = p.reshape(chunk, h, c)

        # Neighbor features are touched exactly once per chunk; one sublane
        # reduction over H; invalid neighbors already zeroed in nf.
        nfc = nf_ref[pl.ds(s, chunk)].astype(jnp.float32)    # [ch, H, C]
        out = jnp.sum(w * nfc, axis=1)                       # [ch, C]

        # Fused norm2 (inference BatchNorm) + ReLU epilogue.
        y = jnp.maximum(out * n2s + n2b, 0.0)
        o_ref[pl.ds(s, chunk), :] = y.astype(o_ref.dtype)
        return carry

    lax.fori_loop(0, tile // chunk, chunk_body, 0)


# ----------------------------------------------------------------------------
# Pallas wrappers
# ----------------------------------------------------------------------------
def _padn(n):
    base = MAX_TILE if n >= 4 * MIN_TILE * MIN_STEPS else MIN_TILE
    return max(base, ((n + base - 1) // base) * base)


def _pick_tile(padn, min_steps=MIN_STEPS):
    # Largest tile that divides padn and still yields >= min_steps grid steps,
    # so small / pooled clouds keep DMA/compute overlap and v7x TC sharding.
    for t in (512, 256, 128):
        if padn % t == 0 and padn // t >= min_steps:
            return t
    return MIN_TILE


def _pad_rows(x, padn):
    n = x.shape[0]
    if padn == n:
        return x
    return jnp.pad(x, ((0, padn - n),) + ((0, 0),) * (x.ndim - 1))


def fused_linear(x, w, scale, shift, act="none", residual=None,
                 out_dtype=jnp.bfloat16, tile_n=None):
    """act((x @ w) * scale + shift [+ residual]) — Linear + folded BN fused.

    x / w / residual travel in bf16 (half the HBM traffic); MXU accumulates in
    f32.  When the caller passes pre-padded rows no pad / slice copies are
    emitted.
    """
    n, cin = x.shape
    cout = w.shape[1]
    padn = _padn(n)
    tile_n = tile_n or _pick_tile(padn)
    xp = _pad_rows(x.astype(jnp.bfloat16), padn)
    wb = w.astype(jnp.bfloat16)
    scale2 = jnp.asarray(scale, jnp.float32).reshape(1, cout)
    shift2 = jnp.asarray(shift, jnp.float32).reshape(1, cout)
    grid = (padn // tile_n,)
    x_spec = pl.BlockSpec((tile_n, cin), lambda i: (i, 0))
    w_spec = pl.BlockSpec((cin, cout), lambda i: (0, 0))
    v_spec = pl.BlockSpec((1, cout), lambda i: (0, 0))
    o_spec = pl.BlockSpec((tile_n, cout), lambda i: (i, 0))
    out_shape = jax.ShapeDtypeStruct((padn, cout), out_dtype)
    if residual is None:
        y = pl.pallas_call(
            functools.partial(_linear_kernel, act=act),
            grid=grid,
            in_specs=[x_spec, w_spec, v_spec, v_spec],
            out_specs=o_spec,
            out_shape=out_shape,
            compiler_params=_COMPILER_PARAMS,
        )(xp, wb, scale2, shift2)
    else:
        rp = _pad_rows(residual.astype(jnp.bfloat16), padn)
        r_spec = pl.BlockSpec((tile_n, cout), lambda i: (i, 0))
        y = pl.pallas_call(
            functools.partial(_linear_res_kernel, act=act),
            grid=grid,
            in_specs=[x_spec, w_spec, v_spec, v_spec, r_spec],
            out_specs=o_spec,
            out_shape=out_shape,
            compiler_params=_COMPILER_PARAMS,
        )(xp, wb, scale2, shift2, rp)
    return y[:n]


def kpconvx_aggregate(rel, nf, feat, conv, n2_scale, n2_shift, tile_n=None):
    """Fused KPConvX/KPConvD aggregation with in-kernel modulation + norm2+ReLU."""
    n, h, _ = rel.shape
    k, c = conv["dw_w"].shape
    padn = _padn(n)
    tile_n = tile_n or _pick_tile(padn)
    chunk = min(CHUNK, tile_n)
    relp = _pad_rows(rel.astype(jnp.float32), padn)
    nfp = _pad_rows(nf.astype(jnp.bfloat16), padn)
    has_mod = conv["groups"] > 0

    def _bcast(shape):
        nd = len(shape)
        return pl.BlockSpec(shape, lambda i, _nd=nd: (0,) * _nd)

    args = [relp, nfp]
    specs = [pl.BlockSpec((tile_n, h, 3), lambda i: (i, 0, 0)),
             pl.BlockSpec((tile_n, h, c), lambda i: (i, 0, 0))]
    scratch = []
    cb = 0
    if has_mod:
        cb = conv["cb"]
        featp = _pad_rows(feat.astype(jnp.bfloat16), padn)
        args += [featp, conv["mod_w"], conv["mod_b"], conv["dw_p"]]
        specs += [pl.BlockSpec((tile_n, c), lambda i: (i, 0)),
                  _bcast((c, k * cb)), _bcast((1, k * cb)), _bcast((1, k * cb))]
        scratch = [pltpu.VMEM((tile_n, k * cb), jnp.float32)]
        args += [conv["kpt"], n2_scale, n2_shift]
        specs += [_bcast((3, k)), _bcast((1, c)), _bcast((1, c))]
    else:
        args += [conv["kpt"], conv["dw_w"], n2_scale, n2_shift]
        specs += [_bcast((3, k)), _bcast((k, c)), _bcast((1, c)), _bcast((1, c))]

    out = pl.pallas_call(
        functools.partial(_kpconvx_kernel,
                          inv_sigma=1.0 / float(conv["radius"]),
                          has_mod=has_mod, chunk=chunk, cb=cb),
        grid=(padn // tile_n,),
        in_specs=specs,
        out_specs=pl.BlockSpec((tile_n, c), lambda i: (i, 0)),
        out_shape=jax.ShapeDtypeStruct((padn, c), jnp.bfloat16),
        scratch_shapes=scratch,
        compiler_params=_COMPILER_PARAMS,
    )(*args)
    return out[:n]


# ----------------------------------------------------------------------------
# Host-side index glue (NumPy / plain JAX)
# ----------------------------------------------------------------------------
def offset2batch_np(offset, n):
    offset = np.asarray(offset, np.int64)
    counts = np.diff(np.concatenate([np.zeros(1, np.int64), offset]))
    return np.repeat(np.arange(len(offset)), counts)


def knn_query(k, coord, offset):
    # TODO(synk): pointops.knn_query replaced by brute-force host KNN (index glue).
    coord_np = np.asarray(coord)
    n = coord_np.shape[0]
    batch = offset2batch_np(offset, n)
    d2 = ((coord_np[:, None, :] - coord_np[None, :, :]) ** 2).sum(-1)
    d2 = np.where(batch[:, None] == batch[None, :], d2, np.inf)
    kk = min(k, n)
    order = np.argsort(d2, axis=1)[:, :kk]
    dist = np.take_along_axis(d2, order, axis=1)
    idx = np.where(np.isfinite(dist), order, -1)
    if kk < k:
        idx = np.concatenate([idx, np.full((n, k - kk), -1, idx.dtype)], axis=1)
    return idx


def make_kernel_points(shell_sizes, radius):
    # TODO(synk): real KPConvX loads optimized kernel dispositions; deterministic
    # fibonacci-sphere shells used here instead.
    pts = [np.zeros((1, 3), np.float64)]
    ns = len(shell_sizes)
    for s in range(1, ns):
        n = shell_sizes[s]
        r = radius * s / (ns - 1)
        i = np.arange(n, dtype=np.float64) + 0.5
        phi = np.arccos(1.0 - 2.0 * i / n)
        theta = np.pi * (1.0 + 5.0 ** 0.5) * i
        pts.append(np.stack([r * np.cos(theta) * np.sin(phi),
                             r * np.sin(theta) * np.sin(phi),
                             r * np.cos(phi)], axis=-1))
    return np.concatenate(pts, 0).astype(np.float32)


# ----------------------------------------------------------------------------
# Modules (forward only; BatchNorm evaluated in inference mode, folded stats)
# ----------------------------------------------------------------------------
def block_forward(p, feat_pad, rel, nbr_idx, nbr_valid):
    identity = feat_pad
    f = fused_linear(feat_pad, p["fc1"]["w"], p["fc1"]["scale"], p["fc1"]["shift"],
                     act="relu")
    # Neighbor gather stays an XLA gather on the (already padded) arrays.
    # TODO(synk): in-kernel DMA gather (memory_space=pl.ANY + scalar-prefetched
    # indices) would avoid materializing nf [N,H,C] in HBM; not implemented.
    nf = jnp.where(nbr_valid, f[nbr_idx], jnp.zeros((), f.dtype))   # [padN,H,C]
    # conv + fused norm2 + ReLU (modulation generator fused in-kernel)
    f = kpconvx_aggregate(rel, nf, f, p["conv"], p["n2_scale"], p["n2_shift"])
    # norm3(fc3(.)) + identity, then ReLU (drop_path_rate = 0 -> identity)
    f = fused_linear(f, p["fc3"]["w"], p["fc3"]["scale"], p["fc3"]["shift"],
                     act="relu", residual=identity)
    return f


def block_sequence_forward(blocks, points, neighbours):
    coord, feat, offset = points
    n = coord.shape[0]
    idx = knn_query(neighbours, coord, offset)                  # [n, H] host KNN
    idx = np.where(idx == -1, n, idx).astype(np.int32)          # sentinel = n
    padn = _padn(n)
    if padn != n:
        idx = np.concatenate(
            [idx, np.full((padn - n, idx.shape[1]), n, np.int32)], axis=0)
    nbr_idx = jnp.asarray(idx)
    nbr_valid = jnp.asarray(idx < n)[..., None]                 # [padN, H, 1]
    # Pad the point axis ONCE for the whole block sequence, slice back at the
    # end.  Relative neighbor coordinates are identical for every block of the
    # sequence -> computed once here (hoisted out of block_forward).
    coord_pad = _pad_rows(coord.astype(jnp.float32), padn)
    feat_pad = _pad_rows(feat.astype(jnp.bfloat16), padn)
    rel = coord_pad[nbr_idx] - coord_pad[:, None, :]            # [padN, H, 3]
    for bp in blocks:
        feat_pad = block_forward(bp, feat_pad, rel, nbr_idx, nbr_valid)
    return [coord, feat_pad[:n], offset]


def grid_pool_forward(p, points, grid_size):
    coord, feat, offset = points
    feat = fused_linear(feat, p["w"], p["scale"], p["shift"], act="relu")
    coord_np = np.asarray(coord)
    n = coord_np.shape[0]
    batch = offset2batch_np(offset, n)
    nb = len(offset)
    start = np.stack([coord_np[batch == b].min(axis=0) for b in range(nb)], axis=0)
    vox = np.floor((coord_np - start[batch]) / grid_size).astype(np.int64)
    dims = vox.max(axis=0) + 1
    key = ((batch * dims[0] + vox[:, 0]) * dims[1] + vox[:, 1]) * dims[2] + vox[:, 2]
    _, cluster, counts = np.unique(key, return_inverse=True, return_counts=True)
    m = int(counts.shape[0])
    cl = jnp.asarray(cluster.astype(np.int32))
    new_coord = jax.ops.segment_sum(coord, cl, num_segments=m) \
        / jnp.asarray(counts, jnp.float32)[:, None]
    new_feat = jax.ops.segment_max(feat, cl, num_segments=m)
    new_batch = np.zeros(m, dtype=np.int64)
    new_batch[cluster] = batch
    new_offset = np.cumsum(np.bincount(new_batch, minlength=nb)).astype(np.int64)
    return [new_coord, new_feat, new_offset], cluster.astype(np.int32)


def unpool_forward(dec, points, skip_points, cluster):
    coord, feat, offset = points
    skip_coord, skip_feat, skip_offset = skip_points
    p, ps = dec["proj"], dec["proj_skip"]
    feat = fused_linear(feat, p["w"], p["scale"], p["shift"], act="relu")
    feat = feat[jnp.asarray(cluster)]
    feat = feat + fused_linear(skip_feat, ps["w"], ps["scale"], ps["shift"], act="relu")
    return [skip_coord, feat, skip_offset]


# ----------------------------------------------------------------------------
# Parameter initialization (deterministic, synthetic)
# ----------------------------------------------------------------------------
def _make_keys(seed):
    key = jax.random.PRNGKey(seed)

    def nxt():
        nonlocal key
        key, sub = jax.random.split(key)
        return sub
    return nxt


def init_bn(nxt, c):
    gamma = 1.0 + 0.1 * jax.random.normal(nxt(), (c,), jnp.float32)
    beta = 0.02 * jax.random.normal(nxt(), (c,), jnp.float32)
    scale = (gamma / jnp.sqrt(1.0 + BN_EPS)).reshape(1, c)   # running stats 0 / 1
    shift = beta.reshape(1, c)
    return scale, shift


def init_linear_bn(nxt, cin, cout, bias):
    w = jax.random.normal(nxt(), (cin, cout), jnp.float32) / math.sqrt(cin)
    scale, shift = init_bn(nxt, cout)
    if bias:
        b = 0.02 * jax.random.normal(nxt(), (cout,), jnp.float32).reshape(1, cout)
        shift = shift + b * scale
    return {"w": jnp.asarray(w, jnp.bfloat16), "scale": scale, "shift": shift}


def init_block(nxt, c, groups, radius, shell_sizes):
    K = int(sum(shell_sizes))
    kp = make_kernel_points(shell_sizes, radius)               # [K, 3]
    dw = jax.random.normal(nxt(), (K, c), jnp.float32) / math.sqrt(K)
    conv = {
        "kpt": jnp.asarray(kp.T, jnp.float32),                 # [3, K]
        "dw_w": dw,                                            # [K, C]
        "radius": float(radius),                               # sigma == radius (spec)
        "groups": int(groups),
    }
    if groups > 0:
        # KPConvX modulations.  Each kernel point's C modulation columns are
        # placed at a 128-lane-aligned offset (CB) so in-kernel per-k slices of
        # the modulation scratch are aligned; group->channel duplication and
        # the depthwise weight fold are baked into these padded layouts.
        cb = ((c + 127) // 128) * 128
        conv["cb"] = cb
        mod_w = jax.random.normal(nxt(), (c, K * groups), jnp.float32) / math.sqrt(c)
        mod_b = 0.02 * jax.random.normal(nxt(), (K * groups,), jnp.float32)
        cpg = c // groups
        g_of_c = np.arange(c) // cpg
        mwn, mbn, dwn = np.asarray(mod_w), np.asarray(mod_b), np.asarray(dw)
        mod_w_p = np.zeros((c, K * cb), np.float32)
        mod_b_p = np.zeros((1, K * cb), np.float32)
        dw_p = np.zeros((1, K * cb), np.float32)
        for k in range(K):
            cols = k * groups + g_of_c                         # len C
            mod_w_p[:, k * cb:k * cb + c] = mwn[:, cols]
            mod_b_p[0, k * cb:k * cb + c] = mbn[cols]
            dw_p[0, k * cb:k * cb + c] = dwn[k]
        conv["mod_w"] = jnp.asarray(mod_w_p, jnp.bfloat16)     # [C, K*CB]
        conv["mod_b"] = jnp.asarray(mod_b_p, jnp.float32)      # [1, K*CB]
        conv["dw_p"] = jnp.asarray(dw_p, jnp.float32)          # [1, K*CB]
    fc1 = init_linear_bn(nxt, c, c, bias=False)
    n2_scale, n2_shift = init_bn(nxt, c)
    fc3 = init_linear_bn(nxt, c, c, bias=False)
    return {"fc1": fc1, "conv": conv, "n2_scale": n2_scale,
            "n2_shift": n2_shift, "fc3": fc3}


def init_kpnext(cfg, seed=0):
    nxt = _make_keys(seed)
    shell = cfg["shell_sizes"]
    first_radius = cfg["subsample_size"] * cfg["kp_radius"]
    layer_radii = [g * cfg["kp_radius"] for g in cfg["grid_sizes"]]
    enc_ch = [cfg["patch_embed_channels"]] + list(cfg["enc_channels"])
    dec_ch = list(cfg["dec_channels"]) + [enc_ch[-1]]
    num_stages = len(cfg["enc_depths"])

    params = {"first_radius": first_radius, "layer_radii": layer_radii}
    params["patch_embed"] = {
        "proj": init_linear_bn(nxt, cfg["in_channels"], cfg["patch_embed_channels"], bias=False),
        "blocks": [init_block(nxt, cfg["patch_embed_channels"], cfg["patch_embed_groups"],
                              first_radius, shell)
                   for _ in range(cfg["patch_embed_depth"])],
    }
    params["enc"], params["dec"] = [], []
    for i in range(num_stages):
        params["enc"].append({
            "down": init_linear_bn(nxt, enc_ch[i], enc_ch[i + 1], bias=False),
            "blocks": [init_block(nxt, enc_ch[i + 1], cfg["enc_groups"][i],
                                  layer_radii[i], shell)
                       for _ in range(cfg["enc_depths"][i])],
        })
        params["dec"].append({
            "proj": init_linear_bn(nxt, dec_ch[i + 1], dec_ch[i], bias=True),
            "proj_skip": init_linear_bn(nxt, enc_ch[i], dec_ch[i], bias=True),
            "blocks": [init_block(nxt, dec_ch[i], cfg["dec_groups"][i],
                                  layer_radii[i], shell)
                       for _ in range(cfg["dec_depths"][i])],
        })
    d0 = cfg["dec_channels"][0]
    nc = cfg["num_classes"]
    ncp = ((nc + 127) // 128) * 128          # lane-dense logits (pad, slice after)
    w2 = np.zeros((d0, ncp), np.float32)
    w2[:, :nc] = np.asarray(jax.random.normal(nxt(), (d0, nc), jnp.float32)
                            / math.sqrt(d0))
    b2 = np.zeros((1, ncp), np.float32)
    b2[0, :nc] = np.asarray(0.02 * jax.random.normal(nxt(), (nc,), jnp.float32))
    params["seg_head"] = {
        "fc1": init_linear_bn(nxt, d0, d0, bias=True),
        "fc2_w": jnp.asarray(w2, jnp.bfloat16),
        "fc2_b": jnp.asarray(b2, jnp.float32),
    }
    return params


# ----------------------------------------------------------------------------
# Full KPNeXt forward
# ----------------------------------------------------------------------------
def kpnext_forward(params, cfg, data):
    coord = jnp.asarray(data["coord"], jnp.float32)
    feat = jnp.asarray(data["feat"], jnp.float32)
    offset = np.asarray(data["offset"], np.int64)
    num_stages = len(cfg["enc_depths"])

    # patch embed
    pe = params["patch_embed"]
    feat = fused_linear(feat, pe["proj"]["w"], pe["proj"]["scale"], pe["proj"]["shift"],
                        act="relu")
    points = [coord, feat, offset]
    points = block_sequence_forward(pe["blocks"], points, cfg["patch_embed_neighbours"])

    # encoder
    skips = [[points]]
    for i in range(num_stages):
        enc = params["enc"][i]
        pooled, cluster = grid_pool_forward(enc["down"], points, cfg["grid_sizes"][i])
        points = block_sequence_forward(enc["blocks"], pooled, cfg["enc_neighbours"][i])
        skips[-1].append(cluster)
        skips.append([points])

    # decoder
    points = skips.pop(-1)[0]
    for i in reversed(range(num_stages)):
        skip_points, cluster = skips.pop(-1)
        dec = params["dec"][i]
        points = unpool_forward(dec, points, skip_points, cluster)
        points = block_sequence_forward(dec["blocks"], points, cfg["dec_neighbours"][i])

    # seg head (final logits in f32, lane-padded to 128 then sliced)
    _, feat, _ = points
    sh = params["seg_head"]
    feat = fused_linear(feat, sh["fc1"]["w"], sh["fc1"]["scale"], sh["fc1"]["shift"],
                        act="relu")
    ncp = sh["fc2_w"].shape[1]
    logits = fused_linear(feat, sh["fc2_w"], jnp.ones((1, ncp), jnp.float32),
                          sh["fc2_b"], act="none", out_dtype=jnp.float32)
    return logits[:, :cfg["num_classes"]]


# ----------------------------------------------------------------------------
if __name__ == "__main__":
    cfg = dict(
        in_channels=4, num_classes=5,
        patch_embed_depth=1, patch_embed_channels=16, patch_embed_groups=4,
        patch_embed_neighbours=8,
        enc_depths=(1, 1), enc_channels=(32, 64), enc_groups=(4, 8), enc_neighbours=(8, 8),
        dec_depths=(1, 1), dec_channels=(16, 32), dec_groups=(4, 4), dec_neighbours=(8, 8),
        grid_sizes=(0.2, 0.4), shell_sizes=(1, 4, 8),
        subsample_size=0.1, kp_radius=1.5,
    )
    key = jax.random.PRNGKey(0)
    k1, k2 = jax.random.split(key)
    n1, n2 = 96, 64
    N = n1 + n2
    coord = jax.random.uniform(k1, (N, 3), jnp.float32)
    feat = jax.random.normal(k2, (N, cfg["in_channels"]), jnp.float32)
    offset = np.array([n1, N], dtype=np.int64)

    params = init_kpnext(cfg, seed=0)
    logits = kpnext_forward(params, cfg, {"coord": coord, "feat": feat, "offset": offset})
    logits = jax.block_until_ready(logits)

    assert logits.shape == (N, cfg["num_classes"])
    assert np.all(np.isfinite(np.asarray(logits)))
    print("KERNEL_OK")
</pallas_src>

<mosaic_0001>
module attributes {stable_mosaic.version = 11 : i64} {
  func.func @_linear_kernel(%arg0: i32, %arg1: memref<128x4xbf16, #tpu.memory_space<vmem>>, %arg2: memref<4x16xbf16, #tpu.memory_space<vmem>>, %arg3: memref<1x16xf32, #tpu.memory_space<vmem>>, %arg4: memref<1x16xf32, #tpu.memory_space<vmem>>, %arg5: memref<128x16xbf16, #tpu.memory_space<vmem>>) attributes {dimension_semantics = [#tpu.dimension_semantics<parallel>], iteration_bounds = array<i64: 2>, scalar_prefetch = 0 : i64, scratch_operands = 0 : i64, tpu.core_type = #tpu.core_type<tc>, window_params = [{transform_indices = @transform_0, window_bounds = array<i64: 128, 4>}, {pipeline_mode = #tpu.pipeline_mode<synchronous>, transform_indices = @transform_1, window_bounds = array<i64: 4, 16>}, {pipeline_mode = #tpu.pipeline_mode<synchronous>, transform_indices = @transform_2, window_bounds = array<i64: 1, 16>}, {pipeline_mode = #tpu.pipeline_mode<synchronous>, transform_indices = @transform_3, window_bounds = array<i64: 1, 16>}, {transform_indices = @transform_4, window_bounds = array<i64: 128, 16>}]} {
    %c0 = arith.constant 0 : index
    %c0_0 = arith.constant 0 : index
    %0 = vector.load %arg1[%c0, %c0_0] : memref<128x4xbf16, #tpu.memory_space<vmem>>, vector<128x4xbf16>
    %c0_1 = arith.constant 0 : index
    %c0_2 = arith.constant 0 : index
    %1 = vector.load %arg2[%c0_1, %c0_2] : memref<4x16xbf16, #tpu.memory_space<vmem>>, vector<4x16xbf16>
    %cst = arith.constant dense<0.000000e+00> : vector<128x16xf32>
    %2 = tpu.matmul %0, %1, %cst {dimension_numbers = #tpu.dot_dimension_numbers<[1], [0], [0], [1], [0, 0, 1, 1], [], []>} : vector<128x4xbf16>, vector<4x16xbf16>, vector<128x16xf32> -> vector<128x16xf32>
    %c0_3 = arith.constant 0 : index
    %c0_4 = arith.constant 0 : index
    %3 = vector.load %arg3[%c0_3, %c0_4] : memref<1x16xf32, #tpu.memory_space<vmem>>, vector<1x16xf32>
    %4 = vector.broadcast %3 : vector<1x16xf32> to vector<128x16xf32>
    %5 = arith.mulf %2, %4 : vector<128x16xf32>
    %c0_5 = arith.constant 0 : index
    %c0_6 = arith.constant 0 : index
    %6 = vector.load %arg4[%c0_5, %c0_6] : memref<1x16xf32, #tpu.memory_space<vmem>>, vector<1x16xf32>
    %7 = vector.broadcast %6 : vector<1x16xf32> to vector<128x16xf32>
    %8 = arith.addf %5, %7 : vector<128x16xf32>
    %cst_7 = arith.constant 0.000000e+00 : f32
    %9 = vector.broadcast %cst_7 : f32 to vector<128x16xf32>
    %10 = arith.maximumf %8, %9 : vector<128x16xf32>
    %11 = arith.truncf %10 : vector<128x16xf32> to vector<128x16xbf16>
    %c0_8 = arith.constant 0 : index
    %c0_9 = arith.constant 0 : index
    %12 = vector.load %arg5[%c0_8, %c0_9] : memref<128x16xbf16, #tpu.memory_space<vmem>>, vector<128x16xbf16>
    tpu.vector_store %arg5[%c0_8, %c0_9], %11 {strides = array<i32>} : memref<128x16xbf16, #tpu.memory_space<vmem>>, vector<128x16xbf16>,
    return
  }
  func.func @transform_0(%arg0: i32) -> (i32, i32) {
    %c0_i32 = arith.constant 0 : i32
    %c0_i32_0 = arith.constant 0 : i32
    return %arg0, %c0_i32 : i32, i32
  }
  func.func @transform_1(%arg0: i32) -> (i32, i32) {
    %c0_i32 = arith.constant 0 : i32
    %c0_i32_0 = arith.constant 0 : i32
    %c0_i32_1 = arith.constant 0 : i32
    return %c0_i32, %c0_i32_0 : i32, i32
  }
  func.func @transform_2(%arg0: i32) -> (i32, i32) {
    %c0_i32 = arith.constant 0 : i32
    %c0_i32_0 = arith.constant 0 : i32
    %c0_i32_1 = arith.constant 0 : i32
    return %c0_i32, %c0_i32_0 : i32, i32
  }
  func.func @transform_3(%arg0: i32) -> (i32, i32) {
    %c0_i32 = arith.constant 0 : i32
    %c0_i32_0 = arith.constant 0 : i32
    %c0_i32_1 = arith.constant 0 : i32
    return %c0_i32, %c0_i32_0 : i32, i32
  }
  func.func @transform_4(%arg0: i32) -> (i32, i32) {
    %c0_i32 = arith.constant 0 : i32
    %c0_i32_0 = arith.constant 0 : i32
    return %arg0, %c0_i32 : i32, i32
  }
}

</mosaic_0001>

<llo_original>
// kernel: tpu_custom_call.1
$region0: #{tpu_custom_call.1}
  #allocation0 [shape = 'u32[]', space=smem, size = 0x4, offset = 0x4, fixed_abs, tag = 'smem constant byte address 0x4 - core index']
  #allocation1 [shape = 'u32[144,128]{1,0:T(1,128)}', space=vmem, size = 0x12000, scoped, tag = 'internal scratch']
  %s0 = inlined_call_operand.vmem [shape: bf16[256,4], index: 0, kind: input, shape index: {}]
  %s1 = inlined_call_operand.vmem [shape: bf16[4,16], index: 1, kind: input, shape index: {}]
  %s2 = inlined_call_operand.vmem [shape: f32[1,16], index: 2, kind: input, shape index: {}]
  %s3 = inlined_call_operand.vmem [shape: f32[1,16], index: 3, kind: input, shape index: {}]
  %s4 = inlined_call_operand.vmem [shape: bf16[256,16], index: 4, kind: output, shape index: {}]
  %s5 = sld [smem:[#allocation0]]
  $region49: #{tpu_custom_call.1} parent=0
    _
  %s7 = ssub.s32 1, %s5
  %s8 = scalar_select 0, %s7, %s5
  loop: start=0, step=1, limit=4
  $region2: #{tpu_custom_call.1} parent=0 // loop_pre_header
    _
  $region3: #{tpu_custom_call.1} parent=0 // loop_header
    %s10 = sphi 0, %s14
    %p11 = scmp.ge.s32.totalorder %s10, 4
    %s20 = sphi 0, %s22
    %s23 = sphi 0, %s20
    %s24 = sphi 0, %s23
    %s40 = sphi 0, %s24
    %s44 = sphi 0, %s44
    %s46 = sphi 0, %s44
    %s47 = sphi 0, %s46
    %s61 = sphi 0, %s47
    %s65 = sphi 0, %s65
    %s67 = sphi 0, %s65
    %s68 = sphi 0, %s67
    %s82 = sphi 0, %s68
    %s86 = sphi 0, %s86
    %s88 = sphi 0, %s86
    %s89 = sphi 0, %s88
    %s103 = sphi 0, %s89
    %s109 = sphi 0, %s111
    %s112 = sphi 0, %s109
    %s113 = sphi 0, %s112
    %s129 = sphi 0, %s113
  $region4: #{tpu_custom_call.1} parent=0 // loop_header_branch
    %13 = sbr.rel (%p11) target = $region8
  $region5: #{tpu_custom_call.1} parent=0 // loop_body
    %s15 = ssub.s32 %s10, 1
    %s16 = ssub.s32 %s10, 2
    %s17 = sadd.s32 %s10, 1
    %s18 = ssub.s32 %s10, %s17
    %p19 = scmp.eq.s32.totalorder %s18, 0
    %s21 = sadd.s32 %s20, 1
    %s22 = scalar_select %p19, %s20, %s21
    %p25 = pneg %p19
    %p26 = scmp.eq.s32.totalorder %s10, 1
    %p27 = por %p25, %p26
    %p28 = scmp.ne.s32.totalorder %s20, %s23
    %p29 = scmp.eq.s32.totalorder %s10, 0
    %p30 = por %p28, %p29
    %p31 = scmp.ne.s32.totalorder %s20, %s23
    %p32 = scmp.eq.s32.totalorder %s15, 1
    %p33 = por %p31, %p32
    %p34 = scmp.ne.s32.totalorder %s23, %s24
    %p35 = scmp.eq.s32.totalorder %s15, 0
    %p36 = por %p34, %p35
    %p37 = scmp.ne.s32.totalorder %s23, %s24
    %p38 = scmp.eq.s32.totalorder %s16, 1
    %p39 = por %p37, %p38
    %p41 = scmp.ne.s32.totalorder %s24, %s40
    %p42 = scmp.eq.s32.totalorder %s16, 0
    %p43 = por %p41, %p42
    %s45 = sadd.s32 %s44, 1
    %p48 = scmp.eq.s32.totalorder %s10, 1
    %p49 = scmp.ne.s32.totalorder %s44, %s46
    %p50 = scmp.eq.s32.totalorder %s10, 0
    %p51 = por %p49, %p50
    %p52 = scmp.ne.s32.totalorder %s44, %s46
    %p53 = scmp.eq.s32.totalorder %s15, 1
    %p54 = por %p52, %p53
    %p55 = scmp.ne.s32.totalorder %s46, %s47
    %p56 = scmp.eq.s32.totalorder %s15, 0
    %p57 = por %p55, %p56
    %p58 = scmp.ne.s32.totalorder %s46, %s47
    %p59 = scmp.eq.s32.totalorder %s16, 1
    %p60 = por %p58, %p59
    %p62 = scmp.ne.s32.totalorder %s47, %s61
    %p63 = scmp.eq.s32.totalorder %s16, 0
    %p64 = por %p62, %p63
    %s66 = sadd.s32 %s65, 1
    %p69 = scmp.eq.s32.totalorder %s10, 1
    %p70 = scmp.ne.s32.totalorder %s65, %s67
    %p71 = scmp.eq.s32.totalorder %s10, 0
    %p72 = por %p70, %p71
    %p73 = scmp.ne.s32.totalorder %s65, %s67
    %p74 = scmp.eq.s32.totalorder %s15, 1
    %p75 = por %p73, %p74
    %p76 = scmp.ne.s32.totalorder %s67, %s68
    %p77 = scmp.eq.s32.totalorder %s15, 0
    %p78 = por %p76, %p77
    %p79 = scmp.ne.s32.totalorder %s67, %s68
    %p80 = scmp.eq.s32.totalorder %s16, 1
    %p81 = por %p79, %p80
    %p83 = scmp.ne.s32.totalorder %s68, %s82
    %p84 = scmp.eq.s32.totalorder %s16, 0
    %p85 = por %p83, %p84
    %s87 = sadd.s32 %s86, 1
    %p90 = scmp.eq.s32.totalorder %s10, 1
    %p91 = scmp.ne.s32.totalorder %s86, %s88
    %p92 = scmp.eq.s32.totalorder %s10, 0
    %p93 = por %p91, %p92
    %p94 = scmp.ne.s32.totalorder %s86, %s88
    %p95 = scmp.eq.s32.totalorder %s15, 1
    %p96 = por %p94, %p95
    %p97 = scmp.ne.s32.totalorder %s88, %s89
    %p98 = scmp.eq.s32.totalorder %s15, 0
    %p99 = por %p97, %p98
    %p100 = scmp.ne.s32.totalorder %s88, %s89
    %p101 = scmp.eq.s32.totalorder %s16, 1
    %p102 = por %p100, %p101
    %p104 = scmp.ne.s32.totalorder %s89, %s103
    %p105 = scmp.eq.s32.totalorder %s16, 0
    %p106 = por %p104, %p105
    %s107 = ssub.s32 %s10, %s17
    %p108 = scmp.eq.s32.totalorder %s107, 0
    %s110 = sadd.s32 %s109, 1
    %s111 = scalar_select %p108, %s109, %s110
    %p114 = pneg %p108
    %p115 = scmp.eq.s32.totalorder %s10, 1
    %p116 = por %p114, %p115
    %p117 = scmp.ne.s32.totalorder %s109, %s112
    %p118 = scmp.eq.s32.totalorder %s10, 0
    %p119 = por %p117, %p118
    %p120 = scmp.ne.s32.totalorder %s109, %s112
    %p121 = scmp.eq.s32.totalorder %s15, 1
    %p122 = por %p120, %p121
    %p123 = scmp.ne.s32.totalorder %s112, %s113
    %p124 = scmp.eq.s32.totalorder %s15, 0
    %p125 = por %p123, %p124
    %p126 = scmp.ne.s32.totalorder %s112, %s113
    %p127 = scmp.eq.s32.totalorder %s16, 1
    %p128 = por %p126, %p127
    %p130 = scmp.ne.s32.totalorder %s113, %s129
    %p131 = scmp.eq.s32.totalorder %s16, 0
    %p132 = por %p130, %p131
    %p133 = scmp.le.s32.totalorder 1, %s10
    %p134 = scmp.lt.s32.totalorder %s10, 3
    %p135 = pnand %p133, %p134
    %p136 = pneg %p135
    // Predicated region
    $region9: #{tpu_custom_call.1} parent=5 // pred_check
      _
    $region10: #{tpu_custom_call.1} parent=5 // pred_check_branch
      %138 = sbr.rel (%p135) target = $region12
    $region11: #{tpu_custom_call.1} parent=5 // pred_region
      %s139 = ssub.s32 %s10, 1
      // Predicated region
      $region13: #{tpu_custom_call.1} parent=11 // pred_check
        %p140 = pneg %p57
      $region14: #{tpu_custom_call.1} parent=11 // pred_check_branch
        %142 = sbr.rel (%p140) target = $region16
      $region15: #{tpu_custom_call.1} parent=11 // pred_region
        _
      $region16: #{tpu_custom_call.1} parent=11 // pred_fallthru
        _
      // Predicated region
      $region17: #{tpu_custom_call.1} parent=11 // pred_check
        %p143 = pneg %p78
      $region18: #{tpu_custom_call.1} parent=11 // pred_check_branch
        %145 = sbr.rel (%p143) target = $region20
      $region19: #{tpu_custom_call.1} parent=11 // pred_region
        _
      $region20: #{tpu_custom_call.1} parent=11 // pred_fallthru
        _
      // Predicated region
      $region21: #{tpu_custom_call.1} parent=11 // pred_check
        %p146 = pneg %p99
      $region22: #{tpu_custom_call.1} parent=11 // pred_check_branch
        %148 = sbr.rel (%p146) target = $region24
      $region23: #{tpu_custom_call.1} parent=11 // pred_region
        _
      $region24: #{tpu_custom_call.1} parent=11 // pred_fallthru
        _
    $region12: #{tpu_custom_call.1} parent=5 // pred_fallthru
      _
    %p149 = scmp.lt.s32.totalorder %s10, 2
    // Predicated region
    $region25: #{tpu_custom_call.1} parent=5 // pred_check
      %p150 = pneg %p149
    $region26: #{tpu_custom_call.1} parent=5 // pred_check_branch
      %152 = sbr.rel (%p150) target = $region28
    $region27: #{tpu_custom_call.1} parent=5 // pred_region
      // Predicated region
      $region29: #{tpu_custom_call.1} parent=27 // pred_check
        %p153 = pneg %p30
      $region30: #{tpu_custom_call.1} parent=27 // pred_check_branch
        %155 = sbr.rel (%p153) target = $region32
      $region31: #{tpu_custom_call.1} parent=27 // pred_region
        %s156 = smul.u32 16, %s10
        %p157 = scmp.lt.s32.totalorder %s156, 31
        %s158 = scalar_select %p157, %s156, 31
        %s159 = smul.addr %s158, 4
        %s160 = scalar_lea.vmem %s0, %s159
        %s161 = smul.u32 16, %s10
      $region32: #{tpu_custom_call.1} parent=27 // pred_fallthru
        _
    $region28: #{tpu_custom_call.1} parent=5 // pred_fallthru
      _
    %p162 = scmp.le.s32.totalorder 1, %s10
    %p163 = scmp.lt.s32.totalorder %s10, 3
    %p164 = pnand %p162, %p163
    %p165 = pneg %p164
    // Predicated region
    $region33: #{tpu_custom_call.1} parent=5 // pred_check
      _
    $region34: #{tpu_custom_call.1} parent=5 // pred_check_branch
      %167 = sbr.rel (%p164) target = $region36
    $region35: #{tpu_custom_call.1} parent=5 // pred_region
      %s168 = ssub.s32 %s10, 1
      %s169 = smul.u32 16, %s15
      %p170 = scmp.lt.s32.totalorder %s169, 31
      %s171 = scalar_select %p170, %s169, 31
      %s172 = smul.addr %s171, 4
      %s173 = scalar_lea.vmem %s0, %s172
      %p174 = pneg %p36
      %p175 = pneg %p33
      %p176 = pneg %p57
      %p177 = pneg %p54
      %p178 = pneg %p78
      %p179 = pneg %p75
      %p180 = pneg %p99
      %p181 = pneg %p96
      %p182 = pneg %p125
      %p183 = pneg %p122
      %s184 = smul.u32 16, %s15
      %p185 = scmp.lt.s32.totalorder %s184, 31
      %s186 = scalar_select %p185, %s184, 31
      %s187 = smul.addr %s186, 4
      %s188 = scalar_lea.vmem %s4, %s187
      %s189 = smul.u32 16, %s15
      %p190 = scmp.lt.s32.totalorder %s189, 31
      %s191 = scalar_select %p190, %s189, 31
      %s192 = smul.addr %s191, 4
      %s193 = scalar_lea.vmem %s0, %s192
      %s194 = smul.u32 16, %s15
      %s195 = smul.u32 16, %s15
      %p196 = scmp.lt.s32.totalorder %s195, 31
      %s197 = scalar_select %p196, %s195, 31
      %s198 = smul.addr %s197, 4
      %s199 = scalar_lea.vmem %s4, %s198
      %s200 = smul.u32 16, %s15
      %v202 = vld [vmem:[%s193] sm:$0xf]
      %v203 = vld [vmem:[%s193 + $0x4] sm:$0xf]
      %v204 = vld [vmem:[%s193 + $0x8] sm:$0xf]
      %v205 = vld [vmem:[%s193 + $0xc] sm:$0xf]
      %v206 = vld [vmem:[%s193 + $0x10] sm:$0xf]
      %v207 = vld [vmem:[%s193 + $0x14] sm:$0xf]
      %v208 = vld [vmem:[%s193 + $0x18] sm:$0xf]
      %v209 = vld [vmem:[%s193 + $0x1c] sm:$0xf]
      %v210 = vld [vmem:[%s193 + $0x20] sm:$0xf]
      %v211 = vld [vmem:[%s193 + $0x24] sm:$0xf]
      %v212 = vld [vmem:[%s193 + $0x28] sm:$0xf]
      %v213 = vld [vmem:[%s193 + $0x2c] sm:$0xf]
      %v214 = vld [vmem:[%s193 + $0x30] sm:$0xf]
      %v215 = vld [vmem:[%s193 + $0x34] sm:$0xf]
      %v216 = vld [vmem:[%s193 + $0x38] sm:$0xf]
      %v217 = vld [vmem:[%s193 + $0x3c] sm:$0xf]
      %v218 = vld [vmem:[%s1] sm:$0x3]
      %v235 = vunpack.c.l.b16 %v202
      %v236 = vunpack.c.l.b16 %v203
      %v237 = vunpack.c.l.b16 %v204
      %v238 = vunpack.c.l.b16 %v205
      %v239 = vunpack.c.l.b16 %v206
      %v240 = vunpack.c.l.b16 %v207
      %v241 = vunpack.c.l.b16 %v208
      %v242 = vunpack.c.l.b16 %v209
      %v243 = vunpack.c.l.b16 %v210
      %v244 = vunpack.c.l.b16 %v211
      %v245 = vunpack.c.l.b16 %v212
      %v246 = vunpack.c.l.b16 %v213
      %v247 = vunpack.c.l.b16 %v214
      %v248 = vunpack.c.l.b16 %v215
      %v249 = vunpack.c.l.b16 %v216
      %v250 = vunpack.c.l.b16 %v217
      %v251 = vpack.c.b16 %v236, %v235
      %v252 = vpack.c.b16 %v238, %v237
      %v253 = vpack.c.b16 %v240, %v239
      %v254 = vpack.c.b16 %v242, %v241
      %v255 = vpack.c.b16 %v244, %v243
      %v256 = vpack.c.b16 %v246, %v245
      %v257 = vpack.c.b16 %v248, %v247
      %v258 = vpack.c.b16 %v250, %v249
      %vm259 = vcmask 31744
      %v261 = vsel %vm259, %v251, 0
      %v264 = vsel %vm259, %v252, 0
      %v267 = vsel %vm259, %v253, 0
      %v270 = vsel %vm259, %v254, 0
      %v273 = vsel %vm259, %v255, 0
      %v276 = vsel %vm259, %v256, 0
      %v279 = vsel %vm259, %v257, 0
      %v282 = vsel %vm259, %v258, 0
      %vm284 = vcmask 1041408
      %v286 = vsel %vm284, %v218, 0
      %288 = vmatprep.subr.bf16.mxu0 0
      %289 = vmatpush1.bf16.msra.mxu0 %v286
      %290 = vmatprep.subr.bf16.mxu0 0
      %291 = vmatpush1.bf16.msra.mxu0 0
      %292 = vmatprep.subr.bf16.mxu0 0
      %293 = vmatpush1.bf16.msra.mxu0 0
      %294 = vmatprep.subr.bf16.mxu0 0
      %295 = vmatpush1.bf16.msra.mxu0 0
      %296 = vmatprep.subr.bf16.mxu0 0
      %297 = vmatpush1.bf16.msra.mxu0 0
      %298 = vmatprep.subr.bf16.mxu0 0
      %299 = vmatpush1.bf16.msra.mxu0 0
      %300 = vmatprep.subr.bf16.mxu0 0
      %301 = vmatpush1.bf16.msra.mxu0 0
      %302 = vmatprep.subr.bf16.mxu0 0
      %303 = vmatpush1.bf16.msra.mxu0 0
      %304 = vmatprep.subr.bf16.mxu0 0
      %305 = vmatpush1.bf16.msra.mxu0 0
      %306 = vmatprep.subr.bf16.mxu0 0
      %307 = vmatpush1.bf16.msra.mxu0 0
      %308 = vmatprep.subr.bf16.mxu0 0
      %309 = vmatpush1.bf16.msra.mxu0 0
      %310 = vmatprep.subr.bf16.mxu0 0
      %311 = vmatpush1.bf16.msra.mxu0 0
      %312 = vmatprep.subr.bf16.mxu0 0
      %313 = vmatpush1.bf16.msra.mxu0 0
      %314 = vmatprep.subr.bf16.mxu0 0
      %315 = vmatpush1.bf16.msra.mxu0 0
      %316 = vmatprep.subr.bf16.mxu0 0
      %317 = vmatpush1.bf16.msra.mxu0 0
      %318 = vmatprep.subr.bf16.mxu0 0
      %319 = vmatpush1.bf16.msra.mxu0 0
      %320 = vmatprep.mubr.bf16.mxu0 0
      %321 = vmatmul.mubr.bf16.gmra.mrb[0].mxu0 %v261
      %v322 = vpop.f32.mrb[0].mxu0
      %v323 = vadd.f32 0.0, %v322
      %v324 = vpop.f32.mrb[0].mxu0
      %v325 = vpop.f32.mrb[0].mxu0
      %v326 = vadd.f32 0.0, %v325
      %v327 = vpop.f32.mrb[0].mxu0
      %328 = vmatprep.mubr.bf16.mxu0 0
      %329 = vmatmul.mubr.bf16.gmra.mrb[0].mxu0 %v264
      %v330 = vpop.f32.mrb[0].mxu0
      %v331 = vadd.f32 0.0, %v330
      %v332 = vpop.f32.mrb[0].mxu0
      %v333 = vpop.f32.mrb[0].mxu0
      %v334 = vadd.f32 0.0, %v333
      %v335 = vpop.f32.mrb[0].mxu0
      %336 = vmatprep.mubr.bf16.mxu0 0
      %337 = vmatmul.mubr.bf16.gmra.mrb[0].mxu0 %v267
      %v338 = vpop.f32.mrb[0].mxu0
      %v339 = vadd.f32 0.0, %v338
      %v340 = vpop.f32.mrb[0].mxu0
      %v341 = vpop.f32.mrb[0].mxu0
      %v342 = vadd.f32 0.0, %v341
      %v343 = vpop.f32.mrb[0].mxu0
      %344 = vmatprep.mubr.bf16.mxu0 0
      %345 = vmatmul.mubr.bf16.gmra.mrb[0].mxu0 %v270
      %v346 = vpop.f32.mrb[0].mxu0
      %v347 = vadd.f32 0.0, %v346
      %v348 = vpop.f32.mrb[0].mxu0
      %v349 = vpop.f32.mrb[0].mxu0
      %v350 = vadd.f32 0.0, %v349
      %v351 = vpop.f32.mrb[0].mxu0
      %352 = vmatprep.mubr.bf16.mxu0 0
      %353 = vmatmul.mubr.bf16.gmra.mrb[0].mxu0 %v273
      %v354 = vpop.f32.mrb[0].mxu0
      %v355 = vadd.f32 0.0, %v354
      %v356 = vpop.f32.mrb[0].mxu0
      %v357 = vpop.f32.mrb[0].mxu0
      %v358 = vadd.f32 0.0, %v357
      %v359 = vpop.f32.mrb[0].mxu0
      %360 = vmatprep.mubr.bf16.mxu0 0
      %361 = vmatmul.mubr.bf16.gmra.mrb[0].mxu0 %v276
      %v362 = vpop.f32.mrb[0].mxu0
      %v363 = vadd.f32 0.0, %v362
      %v364 = vpop.f32.mrb[0].mxu0
      %v365 = vpop.f32.mrb[0].mxu0
      %v366 = vadd.f32 0.0, %v365
      %v367 = vpop.f32.mrb[0].mxu0
      %368 = vmatprep.mubr.bf16.mxu0 0
      %369 = vmatmul.mubr.bf16.gmra.mrb[0].mxu0 %v279
      %v370 = vpop.f32.mrb[0].mxu0
      %v371 = vadd.f32 0.0, %v370
      %v372 = vpop.f32.mrb[0].mxu0
      %v373 = vpop.f32.mrb[0].mxu0
      %v374 = vadd.f32 0.0, %v373
      %v375 = vpop.f32.mrb[0].mxu0
      %376 = vmatprep.mubr.bf16.mxu0 0
      %377 = vmatmul.mubr.bf16.gmra.mrb[0].mxu0 %v282
      %v378 = vpop.f32.mrb[0].mxu0
      %v379 = vadd.f32 0.0, %v378
      %v380 = vpop.f32.mrb[0].mxu0
      %v381 = vpop.f32.mrb[0].mxu0
      %v382 = vadd.f32 0.0, %v381
      %v383 = vpop.f32.mrb[0].mxu0
      %384 = vdwg.mxu0
      %v385 = vld [vmem:[%s2] sm:$0x1]
      %v387 = vlaneseq
      %v388 = vshrl.u32 %v387, 7
      %v389 = vsub.s32 0, %v388
      %v390 = vrot.slane %v385, %v389
      %v392 = vmul.f32 %v323, %v390
      %v393 = vmul.f32 %v326, %v390
      %v394 = vmul.f32 %v331, %v390
      %v395 = vmul.f32 %v334, %v390
      %v396 = vmul.f32 %v339, %v390
      %v397 = vmul.f32 %v342, %v390
      %v398 = vmul.f32 %v347, %v390
      %v399 = vmul.f32 %v350, %v390
      %v400 = vmul.f32 %v355, %v390
      %v401 = vmul.f32 %v358, %v390
      %v402 = vmul.f32 %v363, %v390
      %v403 = vmul.f32 %v366, %v390
      %v404 = vmul.f32 %v371, %v390
      %v405 = vmul.f32 %v374, %v390
      %v406 = vmul.f32 %v379, %v390
      %v407 = vmul.f32 %v382, %v390
      %v408 = vld [vmem:[%s3] sm:$0x1]
      %v410 = vlaneseq
      %v411 = vshrl.u32 %v410, 7
      %v412 = vsub.s32 0, %v411
      %v413 = vrot.slane %v408, %v412
      %v415 = vadd.f32 %v392, %v413
      %v416 = vadd.f32 %v393, %v413
      %v417 = vadd.f32 %v394, %v413
      %v418 = vadd.f32 %v395, %v413
      %v419 = vadd.f32 %v396, %v413
      %v420 = vadd.f32 %v397, %v413
      %v421 = vadd.f32 %v398, %v413
      %v422 = vadd.f32 %v399, %v413
      %v423 = vadd.f32 %v400, %v413
      %v424 = vadd.f32 %v401, %v413
      %v425 = vadd.f32 %v402, %v413
      %v426 = vadd.f32 %v403, %v413
      %v427 = vadd.f32 %v404, %v413
      %v428 = vadd.f32 %v405, %v413
      %v429 = vadd.f32 %v406, %v413
      %v430 = vadd.f32 %v407, %v413
      %v431 = vmax.f32 %v415, 0.0
      %v432 = vmax.f32 %v416, 0.0
      %v433 = vmax.f32 %v417, 0.0
      %v434 = vmax.f32 %v418, 0.0
      %v435 = vmax.f32 %v419, 0.0
      %v436 = vmax.f32 %v420, 0.0
      %v437 = vmax.f32 %v421, 0.0
      %v438 = vmax.f32 %v422, 0.0
      %v439 = vmax.f32 %v423, 0.0
      %v440 = vmax.f32 %v424, 0.0
      %v441 = vmax.f32 %v425, 0.0
      %v442 = vmax.f32 %v426, 0.0
      %v443 = vmax.f32 %v427, 0.0
      %v444 = vmax.f32 %v428, 0.0
      %v445 = vmax.f32 %v429, 0.0
      %v446 = vmax.f32 %v430, 0.0
      %v447 = vpack.c.bf16 %v432, %v431
      %v448 = vpack.c.bf16 %v434, %v433
      %v449 = vpack.c.bf16 %v436, %v435
      %v450 = vpack.c.bf16 %v438, %v437
      %v451 = vpack.c.bf16 %v440, %v439
      %v452 = vpack.c.bf16 %v442, %v441
      %v453 = vpack.c.bf16 %v444, %v443
      %v454 = vpack.c.bf16 %v446, %v445
      %v463 = vunpack.c.l.b16 %v447
      %v464 = vunpack.c.h.b16 %v447
      %v465 = vunpack.c.l.b16 %v448
      %v466 = vunpack.c.h.b16 %v448
      %v467 = vunpack.c.l.b16 %v449
      %v468 = vunpack.c.h.b16 %v449
      %v469 = vunpack.c.l.b16 %v450
      %v470 = vunpack.c.h.b16 %v450
      %v471 = vunpack.c.l.b16 %v451
      %v472 = vunpack.c.h.b16 %v451
      %v473 = vunpack.c.l.b16 %v452
      %v474 = vunpack.c.h.b16 %v452
      %v475 = vunpack.c.l.b16 %v453
      %v476 = vunpack.c.h.b16 %v453
      %v477 = vunpack.c.l.b16 %v454
      %v478 = vunpack.c.h.b16 %v454
      %v479 = vpack.c.b16 %v463, %v463
      %v480 = vpack.c.b16 %v464, %v464
      %v481 = vpack.c.b16 %v465, %v465
      %v482 = vpack.c.b16 %v466, %v466
      %v483 = vpack.c.b16 %v467, %v467
      %v484 = vpack.c.b16 %v468, %v468
      %v485 = vpack.c.b16 %v469, %v469
      %v486 = vpack.c.b16 %v470, %v470
      %v487 = vpack.c.b16 %v471, %v471
      %v488 = vpack.c.b16 %v472, %v472
      %v489 = vpack.c.b16 %v473, %v473
      %v490 = vpack.c.b16 %v474, %v474
      %v491 = vpack.c.b16 %v475, %v475
      %v492 = vpack.c.b16 %v476, %v476
      %v493 = vpack.c.b16 %v477, %v477
      %v494 = vpack.c.b16 %v478, %v478
      %vm511 = vcmask 125952
      %512 = vst.msk [vmem:[%s199] sm:$0xf] %vm511, %v479
      %513 = vst.msk [vmem:[%s199 + $0x4] sm:$0xf] %vm511, %v480
      %514 = vst.msk [vmem:[%s199 + $0x8] sm:$0xf] %vm511, %v481
      %515 = vst.msk [vmem:[%s199 + $0xc] sm:$0xf] %vm511, %v482
      %516 = vst.msk [vmem:[%s199 + $0x10] sm:$0xf] %vm511, %v483
      %517 = vst.msk [vmem:[%s199 + $0x14] sm:$0xf] %vm511, %v484
      %518 = vst.msk [vmem:[%s199 + $0x18] sm:$0xf] %vm511, %v485
      %519 = vst.msk [vmem:[%s199 + $0x1c] sm:$0xf] %vm511, %v486
      %520 = vst.msk [vmem:[%s199 + $0x20] sm:$0xf] %vm511, %v487
      %521 = vst.msk [vmem:[%s199 + $0x24] sm:$0xf] %vm511, %v488
      %522 = vst.msk [vmem:[%s199 + $0x28] sm:$0xf] %vm511, %v489
      %523 = vst.msk [vmem:[%s199 + $0x2c] sm:$0xf] %vm511, %v490
      %524 = vst.msk [vmem:[%s199 + $0x30] sm:$0xf] %vm511, %v491
      %525 = vst.msk [vmem:[%s199 + $0x34] sm:$0xf] %vm511, %v492
      %526 = vst.msk [vmem:[%s199 + $0x38] sm:$0xf] %vm511, %v493
      %527 = vst.msk [vmem:[%s199 + $0x3c] sm:$0xf] %vm511, %v494
      %s528 = smul.u32 16, %s15
      %p529 = scmp.lt.s32.totalorder %s528, 31
      %s530 = scalar_select %p529, %s528, 31
      %s531 = smul.addr %s530, 4
      %s532 = scalar_lea.vmem %s4, %s531
      // Predicated region
      $region37: #{tpu_custom_call.1} parent=35 // pred_check
        %p533 = pneg %p122
      $region38: #{tpu_custom_call.1} parent=35 // pred_check_branch
        %535 = sbr.rel (%p533) target = $region40
      $region39: #{tpu_custom_call.1} parent=35 // pred_region
        %s536 = smul.u32 16, %s15
      $region40: #{tpu_custom_call.1} parent=35 // pred_fallthru
        _
    $region36: #{tpu_custom_call.1} parent=5 // pred_fallthru
      _
    %p537 = scmp.le.s32.totalorder 2, %s10
    // Predicated region
    $region41: #{tpu_custom_call.1} parent=5 // pred_check
      %p538 = pneg %p537
    $region42: #{tpu_custom_call.1} parent=5 // pred_check_branch
      %540 = sbr.rel (%p538) target = $region44
    $region43: #{tpu_custom_call.1} parent=5 // pred_region
      %s541 = ssub.s32 %s10, 2
      // Predicated region
      $region45: #{tpu_custom_call.1} parent=43 // pred_check
        %p542 = pneg %p128
      $region46: #{tpu_custom_call.1} parent=43 // pred_check_branch
        %544 = sbr.rel (%p542) target = $region48
      $region47: #{tpu_custom_call.1} parent=43 // pred_region
        %s545 = smul.u32 16, %s16
        %p546 = scmp.lt.s32.totalorder %s545, 31
        %s547 = scalar_select %p546, %s545, 31
        %s548 = smul.addr %s547, 4
        %s549 = scalar_lea.vmem %s4, %s548
      $region48: #{tpu_custom_call.1} parent=43 // pred_fallthru
        _
    $region44: #{tpu_custom_call.1} parent=5 // pred_fallthru
      _
  $region6: #{tpu_custom_call.1} parent=0 // loop_footer
    %s14 = sadd.s32 1, %s10
  $region7: #{tpu_custom_call.1} parent=0 // loop_footer_branch
    %9 = sbr.rel target = $region3
  $region8: #{tpu_custom_call.1} parent=0 // loop_exit
    _

</llo_original>
